<compile_context>
chip_gen: v7x
topology: tpu7x:2x2x1
jax: 0.10.0
libtpu: 0.0.40
codegen_flags: <defaults>
</compile_context>

<pallas_src>
import functools

import jax
import jax.numpy as jnp
from jax.experimental import pallas as pl
from jax.experimental.pallas import tpu as pltpu


def attention_kernel(img_ref, qp_ref, wi_ref, bi_ref, wl_ref, bl_ref, out_ref):
    """One grid step == one block of `block_b` batch elements.

    img_ref : (block_b*N, Di) VMEM  -- flattened image rows for this block
    qp_ref  : (block_b, H)    VMEM  -- relu(Q @ Wq + bq), hoisted to wrapper
    wi_ref  : (Di, H)         VMEM  -- image projection weight (x @ wi layout)
    bi_ref  : (1, H)          VMEM
    wl_ref  : (1, H)          VMEM  -- final Linear(H, 1) weight, lane-dense
    bl_ref  : (1, 1)          VMEM
    out_ref : (block_b, N)    VMEM  -- softmax over the lane (object) axis
    """
    block_b, n_obj = out_ref.shape
    hidden = wi_ref.shape[1]

    # Image projection: one big (block_b*N, Di) @ (Di, H) MXU matmul, f32 acc.
    ip = jnp.dot(img_ref[...], wi_ref[...], preferred_element_type=jnp.float32)
    ip = jnp.maximum(ip + bi_ref[...], 0.0)                    # (block_b*N, H)
    ip = ip.reshape(block_b, n_obj, hidden)                    # (block_b, N, H)

    # Fused elementwise product with the broadcast question projection.
    # Dropout == identity (eval mode).
    joint = ip * qp_ref[...][:, None, :]                       # (block_b, N, H)

    # Final Linear(H -> 1) as VPU multiply + XLU lane reduction instead of a
    # 1-column MXU matmul.  (bl is a per-logit constant; kept for fidelity.)
    logits = jnp.sum(joint * wl_ref[...], axis=-1) + bl_ref[...]   # (block_b, N)

    # Softmax over the object axis (now the lane axis -> cheap lane reductions)
    m = jnp.max(logits, axis=-1, keepdims=True)
    e = jnp.exp(logits - m)
    denom = jnp.sum(e, axis=-1, keepdims=True)
    out_ref[...] = e * pl.reciprocal(denom, approx=True)


def _choose_block_b(B, N, Di, H, itemsize=4, min_rows=128,
                    vmem_budget=24 * 2**20):
    """Pick the batch-block size.

    Goals: (a) block_b*N >= min_rows so the MXU systolic rows are filled,
           (b) keep >=2 grid steps when possible (v7x: 2 TensorCores),
           (c) stay inside a VMEM budget sized with headroom for v7x (64 MiB
               physical, ~32 MiB default scoped).
    """

    def layout_ok(d):
        # Second-to-last block dims must be multiples of 8 unless they span
        # the full array dimension.
        return d == B or d % 8 == 0

    def vmem_bytes(d):
        rows = d * N
        return itemsize * (
            2 * rows * Di                 # double-buffered image tile
            + 2 * d * H                   # double-buffered qp tile
            + 2 * (Di * H + 2 * H + 1)    # weights (double-buffered by default)
            + rows * H                    # ip / joint intermediate
            + 2 * d * N                   # output tile
        )

    divisors = [d for d in range(1, B + 1)
                if B % d == 0 and layout_ok(d) and vmem_bytes(d) <= vmem_budget]
    if not divisors:  # fall back: ignore the budget (nothing else to tile here)
        divisors = [d for d in range(1, B + 1) if B % d == 0 and layout_ok(d)]

    for d in divisors:  # smallest block that fills the MXU and keeps 2+ steps
        if d * N >= min_rows and B // d >= 2:
            return d
    multi = [d for d in divisors if B // d >= 2]
    return multi[-1] if multi else divisors[-1]


@functools.partial(jax.jit, static_argnames=("block_b", "matmul_dtype"))
def attention_forward(image_features, question_emb, params, *, block_b=None,
                      matmul_dtype=jnp.float32):
    """image_features: (B, N, Di) f32 ; question_emb: (B, Dq) f32 -> (B, N, 1) f32.

    matmul_dtype: use jnp.bfloat16 on v6e/v7x for 2x MXU rate / half the HBM
    and VMEM bytes on the big matmul (epilogue stays f32).
    """
    B, N, Di = image_features.shape
    H = params["wi"].shape[1]

    if block_b is None:
        block_b = _choose_block_b(B, N, Di, H)
    assert B % block_b == 0, (B, block_b)
    rows = block_b * N

    # Hoisted question projection: one tiny (B, Dq) @ (Dq, H) matmul in XLA
    # instead of a 1-row MXU push per grid step.
    qp = jnp.maximum(question_emb @ params["wq"] + params["bq"], 0.0)  # (B, H)
    qp = qp.astype(jnp.float32)

    # Flatten image rows so the kernel sees a lane/sublane-friendly 2-D block.
    img2 = image_features.reshape(B * N, Di).astype(matmul_dtype)
    wi = params["wi"].astype(matmul_dtype)

    grid_spec = pltpu.PrefetchScalarGridSpec(
        num_scalar_prefetch=0,
        grid=(B // block_b,),
        in_specs=[
            pl.BlockSpec((rows, Di), lambda b: (b, 0)),      # image rows
            pl.BlockSpec((block_b, H), lambda b: (b, 0)),    # qp
            pl.BlockSpec((Di, H), lambda b: (0, 0)),         # wi (grid-invariant)
            pl.BlockSpec((1, H), lambda b: (0, 0)),          # bi
            pl.BlockSpec((1, H), lambda b: (0, 0)),          # wl (lane-dense)
            pl.BlockSpec((1, 1), lambda b: (0, 0)),          # bl
        ],
        out_specs=pl.BlockSpec((block_b, N), lambda b: (b, 0)),
    )

    probs = pl.pallas_call(
        attention_kernel,
        out_shape=jax.ShapeDtypeStruct((B, N), jnp.float32),
        grid_spec=grid_spec,
        compiler_params=pltpu.CompilerParams(
            dimension_semantics=("parallel",),
            vmem_limit_bytes=48 * 2**20,
        ),
    )(img2, qp, wi, params["bi"], params["wl"], params["bl"])

    return probs.reshape(B, N, 1)


def _weight_norm_fold(v, g):
    """weight_norm with dim=None: w = g * v / ||v||_F (norm over all elements)."""
    return g * v / jnp.sqrt(jnp.sum(v * v))


def init_params(key, image_dim, question_dim, hidden):
    ks = jax.random.split(key, 8)
    # raw (PyTorch Linear-style) weights (out, in); fold weight_norm; transpose
    # the projections to (in, out) so the kernel computes x @ w.
    vi = jax.random.normal(ks[0], (hidden, image_dim), jnp.float32) * 0.1
    gi = 1.0 + 0.01 * jax.random.normal(ks[1], (), jnp.float32)
    bi = 0.01 * jax.random.normal(ks[2], (1, hidden), jnp.float32)

    vq = jax.random.normal(ks[3], (hidden, question_dim), jnp.float32) * 0.1
    gq = 1.0 + 0.01 * jax.random.normal(ks[4], (), jnp.float32)
    bq = 0.01 * jax.random.normal(ks[5], (1, hidden), jnp.float32)

    vl = jax.random.normal(ks[6], (1, hidden), jnp.float32) * 0.1
    gl = 1.0 + 0.01 * jax.random.normal(ks[7], (), jnp.float32)
    bl = jnp.zeros((1, 1), jnp.float32)

    return {
        "wi": _weight_norm_fold(vi, gi).T,   # (Di, H)
        "bi": bi,                            # (1, H)
        "wq": _weight_norm_fold(vq, gq).T,   # (Dq, H)
        "bq": bq,                            # (1, H)
        "wl": _weight_norm_fold(vl, gl),     # (1, H)  -- kept lane-dense
        "bl": bl,                            # (1, 1)
    }


def attention_ref(image_features, question_emb, params):
    """Pure-JAX reference mirroring the PyTorch forward (eval-mode dropout)."""
    ip = jnp.maximum(image_features @ params["wi"] + params["bi"], 0.0)   # (B,N,H)
    qp = jnp.maximum(question_emb @ params["wq"] + params["bq"], 0.0)     # (B,H)
    joint = ip * qp[:, None, :]                                           # (B,N,H)
    logits = joint @ params["wl"].T + params["bl"]                        # (B,N,1)
    return jax.nn.softmax(logits, axis=1)


if __name__ == "__main__":
    B, N = 16, 16                         # batch, num_objects
    IMAGE_DIM, QUESTION_DIM, HIDDEN = 128, 64, 128   # lane-friendly small dims

    key = jax.random.PRNGKey(0)
    k_img, k_q, k_p = jax.random.split(key, 3)

    image_features = jax.random.normal(k_img, (B, N, IMAGE_DIM), jnp.float32)
    question_emb = jax.random.normal(k_q, (B, QUESTION_DIM), jnp.float32)
    params = init_params(k_p, IMAGE_DIM, QUESTION_DIM, HIDDEN)

    out = attention_forward(image_features, question_emb, params)
    out = jax.block_until_ready(out)

    ref = attention_ref(image_features, question_emb, params)
    assert out.shape == (B, N, 1)
    max_err = float(jnp.max(jnp.abs(out - ref)))
    # approx reciprocal in the softmax epilogue -> compare at 1e-3
    assert jnp.allclose(out, ref, atol=1e-3, rtol=1e-3), (
        f"mismatch vs reference (max abs err {max_err})")

    print("KERNEL_OK")
</pallas_src>

<mosaic_0001>
module attributes {stable_mosaic.version = 11 : i64} {
  func.func @attention_kernel(%arg0: i32, %arg1: memref<128x128xf32, #tpu.memory_space<vmem>>, %arg2: memref<8x128xf32, #tpu.memory_space<vmem>>, %arg3: memref<128x128xf32, #tpu.memory_space<vmem>>, %arg4: memref<1x128xf32, #tpu.memory_space<vmem>>, %arg5: memref<1x128xf32, #tpu.memory_space<vmem>>, %arg6: memref<1x1xf32, #tpu.memory_space<vmem>>, %arg7: memref<8x16xf32, #tpu.memory_space<vmem>>) attributes {dimension_semantics = [#tpu.dimension_semantics<parallel>], iteration_bounds = array<i64: 2>, scalar_prefetch = 0 : i64, scratch_operands = 0 : i64, tpu.core_type = #tpu.core_type<tc>, window_params = [{transform_indices = @transform_0, window_bounds = array<i64: 128, 128>}, {transform_indices = @transform_1, window_bounds = array<i64: 8, 128>}, {pipeline_mode = #tpu.pipeline_mode<synchronous>, transform_indices = @transform_2, window_bounds = array<i64: 128, 128>}, {pipeline_mode = #tpu.pipeline_mode<synchronous>, transform_indices = @transform_3, window_bounds = array<i64: 1, 128>}, {pipeline_mode = #tpu.pipeline_mode<synchronous>, transform_indices = @transform_4, window_bounds = array<i64: 1, 128>}, {pipeline_mode = #tpu.pipeline_mode<synchronous>, transform_indices = @transform_5, window_bounds = array<i64: 1, 1>}, {transform_indices = @transform_6, window_bounds = array<i64: 8, 16>}]} {
    %c0 = arith.constant 0 : index
    %c0_0 = arith.constant 0 : index
    %0 = vector.load %arg1[%c0, %c0_0] : memref<128x128xf32, #tpu.memory_space<vmem>>, vector<128x128xf32>
    %c0_1 = arith.constant 0 : index
    %c0_2 = arith.constant 0 : index
    %1 = vector.load %arg3[%c0_1, %c0_2] : memref<128x128xf32, #tpu.memory_space<vmem>>, vector<128x128xf32>
    %cst = arith.constant dense<0.000000e+00> : vector<128x128xf32>
    %2 = tpu.matmul %0, %1, %cst {dimension_numbers = #tpu.dot_dimension_numbers<[1], [0], [0], [1], [0, 0, 1, 1], [], []>} : vector<128x128xf32>, vector<128x128xf32>, vector<128x128xf32> -> vector<128x128xf32>
    %c0_3 = arith.constant 0 : index
    %c0_4 = arith.constant 0 : index
    %3 = vector.load %arg4[%c0_3, %c0_4] : memref<1x128xf32, #tpu.memory_space<vmem>>, vector<1x128xf32>
    %4 = vector.broadcast %3 : vector<1x128xf32> to vector<128x128xf32>
    %5 = arith.addf %2, %4 : vector<128x128xf32>
    %cst_5 = arith.constant 0.000000e+00 : f32
    %6 = vector.broadcast %cst_5 : f32 to vector<128x128xf32>
    %7 = arith.maximumf %5, %6 : vector<128x128xf32>
    %8 = vector.shape_cast %7 : vector<128x128xf32> to vector<8x16x128xf32>
    %c0_6 = arith.constant 0 : index
    %c0_7 = arith.constant 0 : index
    %9 = vector.load %arg2[%c0_6, %c0_7] : memref<8x128xf32, #tpu.memory_space<vmem>>, vector<8x128xf32>
    %10 = vector.shape_cast %9 : vector<8x128xf32> to vector<8x1x128xf32>
    %11 = vector.broadcast %10 : vector<8x1x128xf32> to vector<8x16x128xf32>
    %12 = arith.mulf %8, %11 : vector<8x16x128xf32>
    %c0_8 = arith.constant 0 : index
    %c0_9 = arith.constant 0 : index
    %13 = vector.load %arg5[%c0_8, %c0_9] : memref<1x128xf32, #tpu.memory_space<vmem>>, vector<1x128xf32>
    %14 = vector.shape_cast %13 : vector<1x128xf32> to vector<1x1x128xf32>
    %15 = vector.broadcast %14 : vector<1x1x128xf32> to vector<8x16x128xf32>
    %16 = arith.mulf %12, %15 : vector<8x16x128xf32>
    %cst_10 = arith.constant dense<0.000000e+00> : vector<8x16xf32>
    %17 = vector.multi_reduction <add>, %16, %cst_10 [2] : vector<8x16x128xf32> to vector<8x16xf32>
    %c0_11 = arith.constant 0 : index
    %c0_12 = arith.constant 0 : index
    %18 = vector.load %arg6[%c0_11, %c0_12] : memref<1x1xf32, #tpu.memory_space<vmem>>, vector<1x1xf32>
    %19 = vector.broadcast %18 : vector<1x1xf32> to vector<8x16xf32>
    %20 = arith.addf %17, %19 : vector<8x16xf32>
    %cst_13 = arith.constant dense<0xFF800000> : vector<8xf32>
    %21 = vector.multi_reduction <maximumf>, %20, %cst_13 [1] : vector<8x16xf32> to vector<8xf32>
    %22 = vector.shape_cast %21 : vector<8xf32> to vector<8x1xf32>
    %23 = vector.broadcast %22 : vector<8x1xf32> to vector<8x16xf32>
    %24 = arith.subf %20, %23 : vector<8x16xf32>
    %25 = math.exp %24 : vector<8x16xf32>
    %cst_14 = arith.constant dense<0.000000e+00> : vector<8xf32>
    %26 = vector.multi_reduction <add>, %25, %cst_14 [1] : vector<8x16xf32> to vector<8xf32>
    %27 = vector.shape_cast %26 : vector<8xf32> to vector<8x1xf32>
    %28 = tpu.reciprocal %27 {approx = true} : vector<8x1xf32> -> vector<8x1xf32>
    %29 = vector.broadcast %28 : vector<8x1xf32> to vector<8x16xf32>
    %30 = arith.mulf %25, %29 : vector<8x16xf32>
    %c0_15 = arith.constant 0 : index
    %c0_16 = arith.constant 0 : index
    %31 = vector.load %arg7[%c0_15, %c0_16] : memref<8x16xf32, #tpu.memory_space<vmem>>, vector<8x16xf32>
    tpu.vector_store %arg7[%c0_15, %c0_16], %30 {strides = array<i32>} : memref<8x16xf32, #tpu.memory_space<vmem>>, vector<8x16xf32>,
    return
  }
  func.func @transform_0(%arg0: i32) -> (i32, i32) {
    %c0_i32 = arith.constant 0 : i32
    %c0_i32_0 = arith.constant 0 : i32
    return %arg0, %c0_i32 : i32, i32
  }
  func.func @transform_1(%arg0: i32) -> (i32, i32) {
    %c0_i32 = arith.constant 0 : i32
    %c0_i32_0 = arith.constant 0 : i32
    return %arg0, %c0_i32 : i32, i32
  }
  func.func @transform_2(%arg0: i32) -> (i32, i32) {
    %c0_i32 = arith.constant 0 : i32
    %c0_i32_0 = arith.constant 0 : i32
    %c0_i32_1 = arith.constant 0 : i32
    return %c0_i32, %c0_i32_0 : i32, i32
  }
  func.func @transform_3(%arg0: i32) -> (i32, i32) {
    %c0_i32 = arith.constant 0 : i32
    %c0_i32_0 = arith.constant 0 : i32
    %c0_i32_1 = arith.constant 0 : i32
    return %c0_i32, %c0_i32_0 : i32, i32
  }
  func.func @transform_4(%arg0: i32) -> (i32, i32) {
    %c0_i32 = arith.constant 0 : i32
    %c0_i32_0 = arith.constant 0 : i32
    %c0_i32_1 = arith.constant 0 : i32
    return %c0_i32, %c0_i32_0 : i32, i32
  }
  func.func @transform_5(%arg0: i32) -> (i32, i32) {
    %c0_i32 = arith.constant 0 : i32
    %c0_i32_0 = arith.constant 0 : i32
    %c0_i32_1 = arith.constant 0 : i32
    return %c0_i32, %c0_i32_0 : i32, i32
  }
  func.func @transform_6(%arg0: i32) -> (i32, i32) {
    %c0_i32 = arith.constant 0 : i32
    %c0_i32_0 = arith.constant 0 : i32
    return %arg0, %c0_i32 : i32, i32
  }
}

</mosaic_0001>

<llo_original>
// kernel: attention_forward.1
$region0: #{attention_forward.1}
  #allocation0 [shape = 'u32[]', space=smem, size = 0x4, offset = 0x4, fixed_abs, tag = 'smem constant byte address 0x4 - core index']
  #allocation1 [shape = 'u32[144,128]{1,0:T(1,128)}', space=vmem, size = 0x12000, scoped, tag = 'internal scratch']
  #allocation2 [shape = 'f32[1,1]{1,0:T(1,128)S(1)}', space=vmem, size = 0x200, scoped, tag = 'scoped memory for attention_forward.1']
  %s0 = inlined_call_operand.hbm [shape: f32[256,128], index: 0, kind: input, shape index: {}]
  %s1 = inlined_call_operand.vmem [shape: f32[16,128], index: 1, kind: input, shape index: {}]
  %s2 = inlined_call_operand.hbm [shape: f32[128,128], index: 2, kind: input, shape index: {}]
  %s3 = inlined_call_operand.vmem [shape: f32[1,128], index: 3, kind: input, shape index: {}]
  %s4 = inlined_call_operand.vmem [shape: f32[1,128], index: 4, kind: input, shape index: {}]
  %s5 = inlined_call_operand.<no memory space> [shape: f32[1,1], index: 5, kind: input, shape index: {}]
  %s6 = inlined_call_operand.hbm [shape: f32[16,16], index: 6, kind: output, shape index: {}]
  %s7 = sld [smem:[#allocation0]]
  $region65: #{attention_forward.1} parent=0
    _
  %s9 = ssub.s32 1, %s7
  %s10 = scalar_select 0, %s9, %s7
  %v11 = vstv %s5
  %12 = vst [vmem:[#allocation2] sm:$0x1] %v11
  $region1: #{attention_forward.1} parent=0
    #allocation3 [shape = 'u8[131072]{0}', space=vmem, size = 0x20000, scoped, tag = 'input window, operand 0']
    #allocation4 [shape = 's32[2]{0}', space=sflag, size = 0x8, scoped, tag = 'scoped memory for attention_forward.1']
    #allocation5 [shape = 's32[2]{0}', space=sflag, size = 0x8, scoped, tag = 'scoped memory for attention_forward.1']
    #allocation6 [shape = 'u8[65536]{0}', space=vmem, size = 0x10000, scoped, tag = 'input window, operand 2, single buffered']
    #allocation7 [shape = 's32[1]{0}', space=sflag, size = 0x4, scoped, tag = 'scoped memory for attention_forward.1']
    #allocation8 [shape = 'u8[8192]{0}', space=vmem, size = 0x2000, scoped, tag = 'output window, operand 0']
    %13 = vsyncpa [#allocation4], 0
    %s14 = scalar_lea.sflag [#allocation4], 1
    %15 = vsyncpa %s14, 0
    %16 = vsyncpa [#allocation7], 0
    %17 = vsyncpa [#allocation5], 0
    %s18 = scalar_lea.sflag [#allocation5], 1
    %19 = vsyncpa %s18, 0
    loop: start=0, step=1, limit=4
    $region2: #{attention_forward.1} parent=1 // loop_pre_header
      _
    $region3: #{attention_forward.1} parent=1 // loop_header
      %s21 = sphi 0, %s25
      %p22 = scmp.ge.s32.totalorder %s21, 4
      %s31 = sphi 0, %s33
      %s34 = sphi 0, %s31
      %s35 = sphi 0, %s34
      %s51 = sphi 0, %s35
      %s57 = sphi 0, %s59
      %s60 = sphi 0, %s57
      %s61 = sphi 0, %s60
      %s77 = sphi 0, %s61
      %s81 = sphi 0, %s81
      %s83 = sphi 0, %s81
      %s84 = sphi 0, %s83
      %s98 = sphi 0, %s84
      %s102 = sphi 0, %s102
      %s104 = sphi 0, %s102
      %s105 = sphi 0, %s104
      %s119 = sphi 0, %s105
      %s123 = sphi 0, %s123
      %s125 = sphi 0, %s123
      %s126 = sphi 0, %s125
      %s140 = sphi 0, %s126
      %s144 = sphi 0, %s144
      %s146 = sphi 0, %s144
      %s147 = sphi 0, %s146
      %s161 = sphi 0, %s147
      %s167 = sphi 0, %s169
      %s170 = sphi 0, %s167
      %s171 = sphi 0, %s170
      %s187 = sphi 0, %s171
    $region4: #{attention_forward.1} parent=1 // loop_header_branch
      %24 = sbr.rel (%p22) target = $region8
    $region5: #{attention_forward.1} parent=1 // loop_body
      %s26 = ssub.s32 %s21, 1
      %s27 = ssub.s32 %s21, 2
      %s28 = sadd.s32 %s21, 1
      %s29 = ssub.s32 %s21, %s28
      %p30 = scmp.eq.s32.totalorder %s29, 0
      %s32 = sadd.s32 %s31, 1
      %s33 = scalar_select %p30, %s31, %s32
      %p36 = pneg %p30
      %p37 = scmp.eq.s32.totalorder %s21, 1
      %p38 = por %p36, %p37
      %p39 = scmp.ne.s32.totalorder %s31, %s34
      %p40 = scmp.eq.s32.totalorder %s21, 0
      %p41 = por %p39, %p40
      %p42 = scmp.ne.s32.totalorder %s31, %s34
      %p43 = scmp.eq.s32.totalorder %s26, 1
      %p44 = por %p42, %p43
      %p45 = scmp.ne.s32.totalorder %s34, %s35
      %p46 = scmp.eq.s32.totalorder %s26, 0
      %p47 = por %p45, %p46
      %p48 = scmp.ne.s32.totalorder %s34, %s35
      %p49 = scmp.eq.s32.totalorder %s27, 1
      %p50 = por %p48, %p49
      %p52 = scmp.ne.s32.totalorder %s35, %s51
      %p53 = scmp.eq.s32.totalorder %s27, 0
      %p54 = por %p52, %p53
      %s55 = ssub.s32 %s21, %s28
      %p56 = scmp.eq.s32.totalorder %s55, 0
      %s58 = sadd.s32 %s57, 1
      %s59 = scalar_select %p56, %s57, %s58
      %p62 = pneg %p56
      %p63 = scmp.eq.s32.totalorder %s21, 1
      %p64 = por %p62, %p63
      %p65 = scmp.ne.s32.totalorder %s57, %s60
      %p66 = scmp.eq.s32.totalorder %s21, 0
      %p67 = por %p65, %p66
      %p68 = scmp.ne.s32.totalorder %s57, %s60
      %p69 = scmp.eq.s32.totalorder %s26, 1
      %p70 = por %p68, %p69
      %p71 = scmp.ne.s32.totalorder %s60, %s61
      %p72 = scmp.eq.s32.totalorder %s26, 0
      %p73 = por %p71, %p72
      %p74 = scmp.ne.s32.totalorder %s60, %s61
      %p75 = scmp.eq.s32.totalorder %s27, 1
      %p76 = por %p74, %p75
      %p78 = scmp.ne.s32.totalorder %s61, %s77
      %p79 = scmp.eq.s32.totalorder %s27, 0
      %p80 = por %p78, %p79
      %s82 = sadd.s32 %s81, 1
      %p85 = scmp.eq.s32.totalorder %s21, 1
      %p86 = scmp.ne.s32.totalorder %s81, %s83
      %p87 = scmp.eq.s32.totalorder %s21, 0
      %p88 = por %p86, %p87
      %p89 = scmp.ne.s32.totalorder %s81, %s83
      %p90 = scmp.eq.s32.totalorder %s26, 1
      %p91 = por %p89, %p90
      %p92 = scmp.ne.s32.totalorder %s83, %s84
      %p93 = scmp.eq.s32.totalorder %s26, 0
      %p94 = por %p92, %p93
      %p95 = scmp.ne.s32.totalorder %s83, %s84
      %p96 = scmp.eq.s32.totalorder %s27, 1
      %p97 = por %p95, %p96
      %p99 = scmp.ne.s32.totalorder %s84, %s98
      %p100 = scmp.eq.s32.totalorder %s27, 0
      %p101 = por %p99, %p100
      %s103 = sadd.s32 %s102, 1
      %p106 = scmp.eq.s32.totalorder %s21, 1
      %p107 = scmp.ne.s32.totalorder %s102, %s104
      %p108 = scmp.eq.s32.totalorder %s21, 0
      %p109 = por %p107, %p108
      %p110 = scmp.ne.s32.totalorder %s102, %s104
      %p111 = scmp.eq.s32.totalorder %s26, 1
      %p112 = por %p110, %p111
      %p113 = scmp.ne.s32.totalorder %s104, %s105
      %p114 = scmp.eq.s32.totalorder %s26, 0
      %p115 = por %p113, %p114
      %p116 = scmp.ne.s32.totalorder %s104, %s105
      %p117 = scmp.eq.s32.totalorder %s27, 1
      %p118 = por %p116, %p117
      %p120 = scmp.ne.s32.totalorder %s105, %s119
      %p121 = scmp.eq.s32.totalorder %s27, 0
      %p122 = por %p120, %p121
      %s124 = sadd.s32 %s123, 1
      %p127 = scmp.eq.s32.totalorder %s21, 1
      %p128 = scmp.ne.s32.totalorder %s123, %s125
      %p129 = scmp.eq.s32.totalorder %s21, 0
      %p130 = por %p128, %p129
      %p131 = scmp.ne.s32.totalorder %s123, %s125
      %p132 = scmp.eq.s32.totalorder %s26, 1
      %p133 = por %p131, %p132
      %p134 = scmp.ne.s32.totalorder %s125, %s126
      %p135 = scmp.eq.s32.totalorder %s26, 0
      %p136 = por %p134, %p135
      %p137 = scmp.ne.s32.totalorder %s125, %s126
      %p138 = scmp.eq.s32.totalorder %s27, 1
      %p139 = por %p137, %p138
      %p141 = scmp.ne.s32.totalorder %s126, %s140
      %p142 = scmp.eq.s32.totalorder %s27, 0
      %p143 = por %p141, %p142
      %s145 = sadd.s32 %s144, 1
      %p148 = scmp.eq.s32.totalorder %s21, 1
      %p149 = scmp.ne.s32.totalorder %s144, %s146
      %p150 = scmp.eq.s32.totalorder %s21, 0
      %p151 = por %p149, %p150
      %p152 = scmp.ne.s32.totalorder %s144, %s146
      %p153 = scmp.eq.s32.totalorder %s26, 1
      %p154 = por %p152, %p153
      %p155 = scmp.ne.s32.totalorder %s146, %s147
      %p156 = scmp.eq.s32.totalorder %s26, 0
      %p157 = por %p155, %p156
      %p158 = scmp.ne.s32.totalorder %s146, %s147
      %p159 = scmp.eq.s32.totalorder %s27, 1
      %p160 = por %p158, %p159
      %p162 = scmp.ne.s32.totalorder %s147, %s161
      %p163 = scmp.eq.s32.totalorder %s27, 0
      %p164 = por %p162, %p163
      %s165 = ssub.s32 %s21, %s28
      %p166 = scmp.eq.s32.totalorder %s165, 0
      %s168 = sadd.s32 %s167, 1
      %s169 = scalar_select %p166, %s167, %s168
      %p172 = pneg %p166
      %p173 = scmp.eq.s32.totalorder %s21, 1
      %p174 = por %p172, %p173
      %p175 = scmp.ne.s32.totalorder %s167, %s170
      %p176 = scmp.eq.s32.totalorder %s21, 0
      %p177 = por %p175, %p176
      %p178 = scmp.ne.s32.totalorder %s167, %s170
      %p179 = scmp.eq.s32.totalorder %s26, 1
      %p180 = por %p178, %p179
      %p181 = scmp.ne.s32.totalorder %s170, %s171
      %p182 = scmp.eq.s32.totalorder %s26, 0
      %p183 = por %p181, %p182
      %p184 = scmp.ne.s32.totalorder %s170, %s171
      %p185 = scmp.eq.s32.totalorder %s27, 1
      %p186 = por %p184, %p185
      %p188 = scmp.ne.s32.totalorder %s171, %s187
      %p189 = scmp.eq.s32.totalorder %s27, 0
      %p190 = por %p188, %p189
      %p191 = scmp.le.s32.totalorder 1, %s21
      %p192 = scmp.lt.s32.totalorder %s21, 3
      %p193 = pnand %p191, %p192
      %p194 = pneg %p193
      // Predicated region
      $region9: #{attention_forward.1} parent=5 // pred_check
        _
      $region10: #{attention_forward.1} parent=5 // pred_check_branch
        %196 = sbr.rel (%p193) target = $region12
      $region11: #{attention_forward.1} parent=5 // pred_region
        %s197 = ssub.s32 %s21, 1
        // Predicated region
        $region13: #{attention_forward.1} parent=11 // pred_check
          %p198 = pneg %p94
        $region14: #{attention_forward.1} parent=11 // pred_check_branch
          %200 = sbr.rel (%p198) target = $region16
        $region15: #{attention_forward.1} parent=11 // pred_region
          %s202 = ssub.s32 2048, 2048
          %203 = vsyncadd [#allocation7], %s202
          %s204 = sshll.u32 [#allocation6], 4
          %s205 = int_to_ptr.vmem [resolvable:$true] %s204
          %210 = dma.hbm_to_vmem [thread:$0]  %s2, 2048, %s205, [#allocation7], 128, 128, 8
        $region16: #{attention_forward.1} parent=11 // pred_fallthru
          _
        // Predicated region
        $region17: #{attention_forward.1} parent=11 // pred_check
          %p211 = pneg %p115
        $region18: #{attention_forward.1} parent=11 // pred_check_branch
          %213 = sbr.rel (%p211) target = $region20
        $region19: #{attention_forward.1} parent=11 // pred_region
          _
        $region20: #{attention_forward.1} parent=11 // pred_fallthru
          _
        // Predicated region
        $region21: #{attention_forward.1} parent=11 // pred_check
          %p214 = pneg %p136
        $region22: #{attention_forward.1} parent=11 // pred_check_branch
          %216 = sbr.rel (%p214) target = $region24
        $region23: #{attention_forward.1} parent=11 // pred_region
          _
        $region24: #{attention_forward.1} parent=11 // pred_fallthru
          _
        // Predicated region
        $region25: #{attention_forward.1} parent=11 // pred_check
          %p217 = pneg %p157
        $region26: #{attention_forward.1} parent=11 // pred_check_branch
          %219 = sbr.rel (%p217) target = $region28
        $region27: #{attention_forward.1} parent=11 // pred_region
          _
        $region28: #{attention_forward.1} parent=11 // pred_fallthru
          _
      $region12: #{attention_forward.1} parent=5 // pred_fallthru
        _
      %p220 = scmp.lt.s32.totalorder %s21, 2
      // Predicated region
      $region29: #{attention_forward.1} parent=5 // pred_check
        %p221 = pneg %p220
      $region30: #{attention_forward.1} parent=5 // pred_check_branch
        %223 = sbr.rel (%p221) target = $region32
      $region31: #{attention_forward.1} parent=5 // pred_region
        // Predicated region
        $region33: #{attention_forward.1} parent=31 // pred_check
          %p224 = pneg %p41
        $region34: #{attention_forward.1} parent=31 // pred_check_branch
          %226 = sbr.rel (%p224) target = $region36
        $region35: #{attention_forward.1} parent=31 // pred_region
          %s227 = sand.u32 %s31, 1
          %s228 = scalar_lea.sflag [#allocation4], %s227
          %s229 = sand.u32 %s31, 1
          %s230 = smul.addr %s229, 128
          %s231 = scalar_lea.vmem [#allocation3], %s230
          %s232 = smul.u32 16, %s21
          %s234 = ssub.s32 2048, 2048
          %235 = vsyncadd %s228, %s234
          %s236 = smul.addr %s232, 128
          %s237 = scalar_lea.hbm %s0, %s236
          %s238 = sshll.u32 %s231, 4
          %s239 = int_to_ptr.vmem [resolvable:$true] %s238
          %244 = dma.hbm_to_vmem [thread:$0]  %s237, 2048, %s239, %s228, 128, 128, 8
        $region36: #{attention_forward.1} parent=31 // pred_fallthru
          _
        // Predicated region
        $region37: #{attention_forward.1} parent=31 // pred_check
          %p245 = pneg %p67
        $region38: #{attention_forward.1} parent=31 // pred_check_branch
          %247 = sbr.rel (%p245) target = $region40
        $region39: #{attention_forward.1} parent=31 // pred_region
          %p248 = scmp.lt.s32.totalorder %s21, 1
          %s249 = scalar_select %p248, %s21, 1
          %s250 = smul.addr %s249, 8
          %s251 = scalar_lea.vmem %s1, %s250
        $region40: #{attention_forward.1} parent=31 // pred_fallthru
          _
      $region32: #{attention_forward.1} parent=5 // pred_fallthru
        _
      %p252 = scmp.le.s32.totalorder 1, %s21
      %p253 = scmp.lt.s32.totalorder %s21, 3
      %p254 = pnand %p252, %p253
      %p255 = pneg %p254
      // Predicated region
      $region41: #{attention_forward.1} parent=5 // pred_check
        _
      $region42: #{attention_forward.1} parent=5 // pred_check_branch
        %257 = sbr.rel (%p254) target = $region44
      $region43: #{attention_forward.1} parent=5 // pred_region
        %s258 = ssub.s32 %s21, 1
        %s259 = sand.u32 %s34, 1
        %s260 = scalar_lea.sflag [#allocation4], %s259
        %s261 = sand.u32 %s34, 1
        %s262 = smul.addr %s261, 128
        %s263 = scalar_lea.vmem [#allocation3], %s262
        // Predicated region
        $region45: #{attention_forward.1} parent=43 // pred_check
          %p264 = pneg %p47
        $region46: #{attention_forward.1} parent=43 // pred_check_branch
          %266 = sbr.rel (%p264) target = $region48
        $region47: #{attention_forward.1} parent=43 // pred_region
          %267 = dma.done %s260, 2048
        $region48: #{attention_forward.1} parent=43 // pred_fallthru
          _
        // Predicated region
        $region49: #{attention_forward.1} parent=43 // pred_check
          %p268 = pneg %p94
        $region50: #{attention_forward.1} parent=43 // pred_check_branch
          %270 = sbr.rel (%p268) target = $region52
        $region51: #{attention_forward.1} parent=43 // pred_region
          %271 = dma.done [#allocation7], 2048
        $region52: #{attention_forward.1} parent=43 // pred_fallthru
          _
        %s272 = sand.u32 %s34, 1
        %s273 = scalar_lea.sflag [#allocation4], %s272
        %s274 = sand.u32 %s34, 1
        %s275 = smul.addr %s274, 128
        %s276 = scalar_lea.vmem [#allocation3], %s275
        %p277 = pneg %p47
        %p278 = pneg %p44
        %p279 = scmp.lt.s32.totalorder %s26, 1
        %s280 = scalar_select %p279, %s26, 1
        %s281 = smul.addr %s280, 8
        %s282 = scalar_lea.vmem %s1, %s281
        %p283 = pneg %p73
        %p284 = pneg %p70
        %p285 = pneg %p94
        %p286 = pneg %p91
        %p287 = pneg %p115
        %p288 = pneg %p112
        %p289 = pneg %p136
        %p290 = pneg %p133
        %p291 = pneg %p157
        %p292 = pneg %p154
        %p293 = pneg %p183
        %p294 = pneg %p180
        %s295 = sand.u32 %s170, 1
        %s296 = scalar_lea.sflag [#allocation5], %s295
        %s297 = sand.u32 %s170, 1
        %s298 = smul.addr %s297, 8
        %s299 = scalar_lea.vmem [#allocation8], %s298
        %s300 = smul.u32 16, %s26
        %p301 = scmp.lt.s32.totalorder %s26, 1
        %s302 = scalar_select %p301, %s26, 1
        %s303 = smul.addr %s302, 8
        %s304 = scalar_lea.vmem %s1, %s303
        %v305 = vld [vmem:[%s263] sm:$0xff]
        %v306 = vld [vmem:[%s263 + $0x8] sm:$0xff]
        %v307 = vld [vmem:[%s263 + $0x10] sm:$0xff]
        %v308 = vld [vmem:[%s263 + $0x18] sm:$0xff]
        %v309 = vld [vmem:[%s263 + $0x20] sm:$0xff]
        %v310 = vld [vmem:[%s263 + $0x28] sm:$0xff]
        %v311 = vld [vmem:[%s263 + $0x30] sm:$0xff]
        %v312 = vld [vmem:[%s263 + $0x38] sm:$0xff]
        %v313 = vld [vmem:[%s263 + $0x40] sm:$0xff]
        %v314 = vld [vmem:[%s263 + $0x48] sm:$0xff]
        %v315 = vld [vmem:[%s263 + $0x50] sm:$0xff]
        %v316 = vld [vmem:[%s263 + $0x58] sm:$0xff]
        %v317 = vld [vmem:[%s263 + $0x60] sm:$0xff]
        %v318 = vld [vmem:[%s263 + $0x68] sm:$0xff]
        %v319 = vld [vmem:[%s263 + $0x70] sm:$0xff]
        %v320 = vld [vmem:[%s263 + $0x78] sm:$0xff]
        %v321 = vld [vmem:[#allocation6] sm:$0xff]
        %v322 = vld [vmem:[#allocation6 + $0x8] sm:$0xff]
        %v323 = vld [vmem:[#allocation6 + $0x10] sm:$0xff]
        %v324 = vld [vmem:[#allocation6 + $0x18] sm:$0xff]
        %v325 = vld [vmem:[#allocation6 + $0x20] sm:$0xff]
        %v326 = vld [vmem:[#allocation6 + $0x28] sm:$0xff]
        %v327 = vld [vmem:[#allocation6 + $0x30] sm:$0xff]
        %v328 = vld [vmem:[#allocation6 + $0x38] sm:$0xff]
        %v329 = vld [vmem:[#allocation6 + $0x40] sm:$0xff]
        %v330 = vld [vmem:[#allocation6 + $0x48] sm:$0xff]
        %v331 = vld [vmem:[#allocation6 + $0x50] sm:$0xff]
        %v332 = vld [vmem:[#allocation6 + $0x58] sm:$0xff]
        %v333 = vld [vmem:[#allocation6 + $0x60] sm:$0xff]
        %v334 = vld [vmem:[#allocation6 + $0x68] sm:$0xff]
        %v335 = vld [vmem:[#allocation6 + $0x70] sm:$0xff]
        %v336 = vld [vmem:[#allocation6 + $0x78] sm:$0xff]
        %v337 = vld [vmem:[%s3] sm:$0x1]
        %v339 = vlaneseq
        %v340 = vshrl.u32 %v339, 7
        %v341 = vsub.s32 0, %v340
        %v342 = vrot.slane %v337, %v341
        %344 = vmatprep.subr.mxu0 0.0
        %345 = vmatpush1.msra.mxu0 %v321
        %346 = vmatprep.subr.mxu0 0.0
        %347 = vmatpush1.msra.mxu0 %v322
        %348 = vmatprep.subr.mxu0 0.0
        %349 = vmatpush1.msra.mxu0 %v323
        %350 = vmatprep.subr.mxu0 0.0
        %351 = vmatpush1.msra.mxu0 %v324
        %352 = vmatprep.subr.mxu0 0.0
        %353 = vmatpush1.msra.mxu0 %v325
        %354 = vmatprep.subr.mxu0 0.0
        %355 = vmatpush1.msra.mxu0 %v326
        %356 = vmatprep.subr.mxu0 0.0
        %357 = vmatpush1.msra.mxu0 %v327
        %358 = vmatprep.subr.mxu0 0.0
        %359 = vmatpush1.msra.mxu0 %v328
        %360 = vmatprep.subr.mxu0 0.0
        %361 = vmatpush1.msra.mxu0 %v329
        %362 = vmatprep.subr.mxu0 0.0
        %363 = vmatpush1.msra.mxu0 %v330
        %364 = vmatprep.subr.mxu0 0.0
        %365 = vmatpush1.msra.mxu0 %v331
        %366 = vmatprep.subr.mxu0 0.0
        %367 = vmatpush1.msra.mxu0 %v332
        %368 = vmatprep.subr.mxu0 0.0
        %369 = vmatpush1.msra.mxu0 %v333
        %370 = vmatprep.subr.mxu0 0.0
        %371 = vmatpush1.msra.mxu0 %v334
        %372 = vmatprep.subr.mxu0 0.0
        %373 = vmatpush1.msra.mxu0 %v335
        %374 = vmatprep.subr.mxu0 0.0
        %375 = vmatpush1.msra.mxu0 %v336
        %376 = vmatprep.subr.mxu0 0.0
        %377 = vmatpush1.msra.mxu0 0.0
        %378 = vmatprep.subr.mxu0 0.0
        %379 = vmatpush1.msra.mxu0 0.0
        %380 = vmatprep.subr.mxu0 0.0
        %381 = vmatpush1.msra.mxu0 0.0
        %382 = vmatprep.subr.mxu0 0.0
        %383 = vmatpush1.msra.mxu0 0.0
        %384 = vmatprep.subr.mxu0 0.0
        %385 = vmatpush1.msra.mxu0 0.0
        %386 = vmatprep.subr.mxu0 0.0
        %387 = vmatpush1.msra.mxu0 0.0
        %388 = vmatprep.subr.mxu0 0.0
        %389 = vmatpush1.msra.mxu0 0.0
        %390 = vmatprep.subr.mxu0 0.0
        %391 = vmatpush1.msra.mxu0 0.0
        %392 = vmatprep.subr.mxu0 0.0
        %393 = vmatpush1.msra.mxu0 0.0
        %394 = vmatprep.subr.mxu0 0.0
        %395 = vmatpush1.msra.mxu0 0.0
        %396 = vmatprep.subr.mxu0 0.0
        %397 = vmatpush1.msra.mxu0 0.0
        %398 = vmatprep.subr.mxu0 0.0
        %399 = vmatpush1.msra.mxu0 0.0
        %400 = vmatprep.subr.mxu0 0.0
        %401 = vmatpush1.msra.mxu0 0.0
        %402 = vmatprep.subr.mxu0 0.0
        %403 = vmatpush1.msra.mxu0 0.0
        %404 = vmatprep.subr.mxu0 0.0
        %405 = vmatpush1.msra.mxu0 0.0
        %406 = vmatprep.subr.mxu0 0.0
        %407 = vmatpush1.msra.mxu0 0.0
        %408 = vmatprep.mubr.f32.mxu0 0.0
        %409 = vmatmul.mubr.f32.gmra.mrb[0].mxu0 %v305
        %v410 = vpop.f32.mrb[0].mxu0
        %v411 = vadd.f32 %v342, %v410
        %v412 = vpop.f32.mrb[0].mxu0
        %413 = vmatprep.mubr.f32.mxu0 0.0
        %414 = vmatmul.mubr.f32.gmra.mrb[0].mxu0 %v306
        %v415 = vpop.f32.mrb[0].mxu0
        %v416 = vadd.f32 %v342, %v415
        %v417 = vpop.f32.mrb[0].mxu0
        %418 = vmatprep.mubr.f32.mxu0 0.0
        %419 = vmatmul.mubr.f32.gmra.mrb[0].mxu0 %v307
        %v420 = vpop.f32.mrb[0].mxu0
        %v421 = vadd.f32 %v342, %v420
        %v422 = vpop.f32.mrb[0].mxu0
        %423 = vmatprep.mubr.f32.mxu0 0.0
        %424 = vmatmul.mubr.f32.gmra.mrb[0].mxu0 %v308
        %v425 = vpop.f32.mrb[0].mxu0
        %v426 = vadd.f32 %v342, %v425
        %v427 = vpop.f32.mrb[0].mxu0
        %428 = vmatprep.mubr.f32.mxu0 0.0
        %429 = vmatmul.mubr.f32.gmra.mrb[0].mxu0 %v309
        %v430 = vpop.f32.mrb[0].mxu0
        %v431 = vadd.f32 %v342, %v430
        %v432 = vpop.f32.mrb[0].mxu0
        %433 = vmatprep.mubr.f32.mxu0 0.0
        %434 = vmatmul.mubr.f32.gmra.mrb[0].mxu0 %v310
        %v435 = vpop.f32.mrb[0].mxu0
        %v436 = vadd.f32 %v342, %v435
        %v437 = vpop.f32.mrb[0].mxu0
        %438 = vmatprep.mubr.f32.mxu0 0.0
        %439 = vmatmul.mubr.f32.gmra.mrb[0].mxu0 %v311
        %v440 = vpop.f32.mrb[0].mxu0
        %v441 = vadd.f32 %v342, %v440
        %v442 = vpop.f32.mrb[0].mxu0
        %443 = vmatprep.mubr.f32.mxu0 0.0
        %444 = vmatmul.mubr.f32.gmra.mrb[0].mxu0 %v312
        %v445 = vpop.f32.mrb[0].mxu0
        %v446 = vadd.f32 %v342, %v445
        %v447 = vpop.f32.mrb[0].mxu0
        %448 = vmatprep.mubr.f32.mxu0 0.0
        %449 = vmatmul.mubr.f32.gmra.mrb[0].mxu0 %v313
        %v450 = vpop.f32.mrb[0].mxu0
        %v451 = vadd.f32 %v342, %v450
        %v452 = vpop.f32.mrb[0].mxu0
        %453 = vmatprep.mubr.f32.mxu0 0.0
        %454 = vmatmul.mubr.f32.gmra.mrb[0].mxu0 %v314
        %v455 = vpop.f32.mrb[0].mxu0
        %v456 = vadd.f32 %v342, %v455
        %v457 = vpop.f32.mrb[0].mxu0
        %458 = vmatprep.mubr.f32.mxu0 0.0
        %459 = vmatmul.mubr.f32.gmra.mrb[0].mxu0 %v315
        %v460 = vpop.f32.mrb[0].mxu0
        %v461 = vadd.f32 %v342, %v460
        %v462 = vpop.f32.mrb[0].mxu0
        %463 = vmatprep.mubr.f32.mxu0 0.0
        %464 = vmatmul.mubr.f32.gmra.mrb[0].mxu0 %v316
        %v465 = vpop.f32.mrb[0].mxu0
        %v466 = vadd.f32 %v342, %v465
        %v467 = vpop.f32.mrb[0].mxu0
        %468 = vmatprep.mubr.f32.mxu0 0.0
        %469 = vmatmul.mubr.f32.gmra.mrb[0].mxu0 %v317
        %v470 = vpop.f32.mrb[0].mxu0
        %v471 = vadd.f32 %v342, %v470
        %v472 = vpop.f32.mrb[0].mxu0
        %473 = vmatprep.mubr.f32.mxu0 0.0
        %474 = vmatmul.mubr.f32.gmra.mrb[0].mxu0 %v318
        %v475 = vpop.f32.mrb[0].mxu0
        %v476 = vadd.f32 %v342, %v475
        %v477 = vpop.f32.mrb[0].mxu0
        %478 = vmatprep.mubr.f32.mxu0 0.0
        %479 = vmatmul.mubr.f32.gmra.mrb[0].mxu0 %v319
        %v480 = vpop.f32.mrb[0].mxu0
        %v481 = vadd.f32 %v342, %v480
        %v482 = vpop.f32.mrb[0].mxu0
        %483 = vmatprep.mubr.f32.mxu0 0.0
        %484 = vmatmul.mubr.f32.gmra.mrb[0].mxu0 %v320
        %v485 = vpop.f32.mrb[0].mxu0
        %v486 = vadd.f32 %v342, %v485
        %v487 = vpop.f32.mrb[0].mxu0
        %488 = vdwg.mxu0
        %v489 = vmax.f32 %v411, 0.0
        %v490 = vmax.f32 %v416, 0.0
        %v491 = vmax.f32 %v421, 0.0
        %v492 = vmax.f32 %v426, 0.0
        %v493 = vmax.f32 %v431, 0.0
        %v494 = vmax.f32 %v436, 0.0
        %v495 = vmax.f32 %v441, 0.0
        %v496 = vmax.f32 %v446, 0.0
        %v497 = vmax.f32 %v451, 0.0
        %v498 = vmax.f32 %v456, 0.0
        %v499 = vmax.f32 %v461, 0.0
        %v500 = vmax.f32 %v466, 0.0
        %v501 = vmax.f32 %v471, 0.0
        %v502 = vmax.f32 %v476, 0.0
        %v503 = vmax.f32 %v481, 0.0
        %v504 = vmax.f32 %v486, 0.0
        %v505 = vld [vmem:[%s304] sm:$0xff]
        %v507 = vcombine.high %v505, %v505
        %v509 = vunpack.c.l.s4 1966171168
        %v510 = vunpack.c.0.s8 %v509
        %v511 = vlaneseq
        %v512 = vshrl.u32 %v511, 7
        %v513 = vsub.s32 %v510, %v512
        %v514 = vrot.slane %v505, %v513
        %v516 = vunpack.c.l.s4 1966171168
        %v517 = vunpack.c.0.s8 %v516
        %v518 = vlaneseq
        %v519 = vshrl.u32 %v518, 7
        %v520 = vsub.s32 %v517, %v519
        %v521 = vrot.slane %v507, %v520
        %v522 = vcombine.high %v514, %v514
        %v523 = vcombine.high %v521, %v521
        %v525 = vunpack.c.l.s4 1966171168
        %v526 = vunpack.c.0.s8 %v525
        %v527 = vlaneseq
        %v528 = vshrl.u32 %v527, 7
        %v529 = vsub.s32 %v526, %v528
        %v530 = vrot.slane %v514, %v529
        %v532 = vunpack.c.l.s4 1966171168
        %v533 = vunpack.c.0.s8 %v532
        %v534 = vlaneseq
        %v535 = vshrl.u32 %v534, 7
        %v536 = vsub.s32 %v533, %v535
        %v537 = vrot.slane %v521, %v536
        %v539 = vunpack.c.l.s4 1966171168
        %v540 = vunpack.c.0.s8 %v539
        %v541 = vlaneseq
        %v542 = vshrl.u32 %v541, 7
        %v543 = vsub.s32 %v540, %v542
        %v544 = vrot.slane %v522, %v543
        %v546 = vunpack.c.l.s4 1966171168
        %v547 = vunpack.c.0.s8 %v546
        %v548 = vlaneseq
        %v549 = vshrl.u32 %v548, 7
        %v550 = vsub.s32 %v547, %v549
        %v551 = vrot.slane %v523, %v550
        %v552 = vcombine.high %v530, %v530
        %v553 = vcombine.high %v537, %v537
        %v554 = vcombine.high %v544, %v544
        %v555 = vcombine.high %v551, %v551
        %v556 = vlaneseq
        %v557 = vshrl.u32 %v556, 7
        %v558 = vsub.s32 0, %v557
        %v559 = vrot.slane %v530, %v558
        %v560 = vlaneseq
        %v561 = vshrl.u32 %v560, 7
        %v562 = vsub.s32 0, %v561
        %v563 = vrot.slane %v544, %v562
        %v564 = vlaneseq
        %v565 = vshrl.u32 %v564, 7
        %v566 = vsub.s32 0, %v565
        %v567 = vrot.slane %v552, %v566
        %v568 = vlaneseq
        %v569 = vshrl.u32 %v568, 7
        %v570 = vsub.s32 0, %v569
        %v571 = vrot.slane %v554, %v570
        %v572 = vlaneseq
        %v573 = vshrl.u32 %v572, 7
        %v574 = vsub.s32 0, %v573
        %v575 = vrot.slane %v537, %v574
        %v576 = vlaneseq
        %v577 = vshrl.u32 %v576, 7
        %v578 = vsub.s32 0, %v577
        %v579 = vrot.slane %v551, %v578
        %v580 = vlaneseq
        %v581 = vshrl.u32 %v580, 7
        %v582 = vsub.s32 0, %v581
        %v583 = vrot.slane %v553, %v582
        %v584 = vlaneseq
        %v585 = vshrl.u32 %v584, 7
        %v586 = vsub.s32 0, %v585
        %v587 = vrot.slane %v555, %v586
        %v596 = vmul.f32 %v489, %v559
        %v597 = vmul.f32 %v490, %v559
        %v598 = vmul.f32 %v491, %v563
        %v599 = vmul.f32 %v492, %v563
        %v600 = vmul.f32 %v493, %v567
        %v601 = vmul.f32 %v494, %v567
        %v602 = vmul.f32 %v495, %v571
        %v603 = vmul.f32 %v496, %v571
        %v604 = vmul.f32 %v497, %v575
        %v605 = vmul.f32 %v498, %v575
        %v606 = vmul.f32 %v499, %v579
        %v607 = vmul.f32 %v500, %v579
        %v608 = vmul.f32 %v501, %v583
        %v609 = vmul.f32 %v502, %v583
        %v610 = vmul.f32 %v503, %v587
        %v611 = vmul.f32 %v504, %v587
        %v612 = vld [vmem:[%s4] sm:$0x1]
        %v614 = vlaneseq
        %v615 = vshrl.u32 %v614, 7
        %v616 = vsub.s32 0, %v615
        %v617 = vrot.slane %v612, %v616
        %v619 = vmul.f32 %v596, %v617
        %v620 = vmul.f32 %v597, %v617
        %v621 = vmul.f32 %v598, %v617
        %v622 = vmul.f32 %v599, %v617
        %v623 = vmul.f32 %v600, %v617
        %v624 = vmul.f32 %v601, %v617
        %v625 = vmul.f32 %v602, %v617
        %v626 = vmul.f32 %v603, %v617
        %v627 = vmul.f32 %v604, %v617
        %v628 = vmul.f32 %v605, %v617
        %v629 = vmul.f32 %v606, %v617
        %v630 = vmul.f32 %v607, %v617
        %v631 = vmul.f32 %v608, %v617
        %v632 = vmul.f32 %v609, %v617
        %v633 = vmul.f32 %v610, %v617
        %v634 = vmul.f32 %v611, %v617
        %635 = vadd.xlane.f32.xlu0 %v619
        %v636 = vpop.xlane.xlu0 %635
        %637 = vadd.xlane.f32.xlu0 %v620
        %v638 = vpop.xlane.xlu0 %637
        %639 = vadd.xlane.f32.xlu0 %v621
        %v640 = vpop.xlane.xlu0 %639
        %641 = vadd.xlane.f32.xlu0 %v622
        %v642 = vpop.xlane.xlu0 %641
        %643 = vadd.xlane.f32.xlu0 %v623
        %v644 = vpop.xlane.xlu0 %643
        %645 = vadd.xlane.f32.xlu0 %v624
        %v646 = vpop.xlane.xlu0 %645
        %647 = vadd.xlane.f32.xlu0 %v625
        %v648 = vpop.xlane.xlu0 %647
        %649 = vadd.xlane.f32.xlu0 %v626
        %v650 = vpop.xlane.xlu0 %649
        %651 = vadd.xlane.f32.xlu0 %v627
        %v652 = vpop.xlane.xlu0 %651
        %653 = vadd.xlane.f32.xlu0 %v628
        %v654 = vpop.xlane.xlu0 %653
        %655 = vadd.xlane.f32.xlu0 %v629
        %v656 = vpop.xlane.xlu0 %655
        %657 = vadd.xlane.f32.xlu0 %v630
        %v658 = vpop.xlane.xlu0 %657
        %659 = vadd.xlane.f32.xlu0 %v631
        %v660 = vpop.xlane.xlu0 %659
        %661 = vadd.xlane.f32.xlu0 %v632
        %v662 = vpop.xlane.xlu0 %661
        %663 = vadd.xlane.f32.xlu0 %v633
        %v664 = vpop.xlane.xlu0 %663
        %665 = vadd.xlane.f32.xlu0 %v634
        %v666 = vpop.xlane.xlu0 %665
        %v667 = vld [vmem:[#allocation2] sm:$0x1]
        %v669 = vlaneseq
        %v670 = vshrl.u32 %v669, 7
        %v671 = vsub.s32 0, %v670
        %v672 = vrot.slane %v667, %v671
        %673 = vset.pattern.permute.xlu0 0
        %674 = vperm.xlu0 %673, %v672
        %v675 = vpop.permute.xlu0 %674
        %v677 = vadd.f32 %v636, %v675
        %v678 = vadd.f32 %v638, %v675
        %v679 = vadd.f32 %v640, %v675
        %v680 = vadd.f32 %v642, %v675
        %v681 = vadd.f32 %v644, %v675
        %v682 = vadd.f32 %v646, %v675
        %v683 = vadd.f32 %v648, %v675
        %v684 = vadd.f32 %v650, %v675
        %v685 = vadd.f32 %v652, %v675
        %v686 = vadd.f32 %v654, %v675
        %v687 = vadd.f32 %v656, %v675
        %v688 = vadd.f32 %v658, %v675
        %v689 = vadd.f32 %v660, %v675
        %v690 = vadd.f32 %v662, %v675
        %v691 = vadd.f32 %v664, %v675
        %v692 = vadd.f32 %v666, %v675
        %v709 = vlaneseq
        %v710 = vand.u32 %v709, 127
        %v711 = vlaneseq
        %v712 = vshrl.u32 %v711, 7
        %v713 = vsub.s32 %v710, %v712
        %v714 = vrot.slane %v677, %v713
        %v715 = vadd.s32 %v710, 4294967288
        %v716 = vlaneseq
        %v717 = vshrl.u32 %v716, 7
        %v718 = vsub.s32 %v715, %v717
        %v719 = vrot.slane %v678, %v718
        %vm720 = vcmask 130112
        %v721 = vsel %vm720, %v719, %v714
        %v722 = vlaneseq
        %v723 = vshrl.u32 %v722, 7
        %v724 = vsub.s32 %v710, %v723
        %v725 = vrot.slane %v679, %v724
        %v726 = vlaneseq
        %v727 = vshrl.u32 %v726, 7
        %v728 = vsub.s32 %v715, %v727
        %v729 = vrot.slane %v680, %v728
        %v730 = vsel %vm720, %v729, %v725
        %v731 = vlaneseq
        %v732 = vshrl.u32 %v731, 7
        %v733 = vsub.s32 %v710, %v732
        %v734 = vrot.slane %v681, %v733
        %v735 = vlaneseq
        %v736 = vshrl.u32 %v735, 7
        %v737 = vsub.s32 %v715, %v736
        %v738 = vrot.slane %v682, %v737
        %v739 = vsel %vm720, %v738, %v734
        %v740 = vlaneseq
        %v741 = vshrl.u32 %v740, 7
        %v742 = vsub.s32 %v710, %v741
        %v743 = vrot.slane %v683, %v742
        %v744 = vlaneseq
        %v745 = vshrl.u32 %v744, 7
        %v746 = vsub.s32 %v715, %v745
        %v747 = vrot.slane %v684, %v746
        %v748 = vsel %vm720, %v747, %v743
        %v749 = vlaneseq
        %v750 = vshrl.u32 %v749, 7
        %v751 = vsub.s32 %v710, %v750
        %v752 = vrot.slane %v685, %v751
        %v753 = vlaneseq
        %v754 = vshrl.u32 %v753, 7
        %v755 = vsub.s32 %v715, %v754
        %v756 = vrot.slane %v686, %v755
        %v757 = vsel %vm720, %v756, %v752
        %v758 = vlaneseq
        %v759 = vshrl.u32 %v758, 7
        %v760 = vsub.s32 %v710, %v759
        %v761 = vrot.slane %v687, %v760
        %v762 = vlaneseq
        %v763 = vshrl.u32 %v762, 7
        %v764 = vsub.s32 %v715, %v763
        %v765 = vrot.slane %v688, %v764
        %v766 = vsel %vm720, %v765, %v761
        %v767 = vlaneseq
        %v768 = vshrl.u32 %v767, 7
        %v769 = vsub.s32 %v710, %v768
        %v770 = vrot.slane %v689, %v769
        %v771 = vlaneseq
        %v772 = vshrl.u32 %v771, 7
        %v773 = vsub.s32 %v715, %v772
        %v774 = vrot.slane %v690, %v773
        %v775 = vsel %vm720, %v774, %v770
        %v776 = vlaneseq
        %v777 = vshrl.u32 %v776, 7
        %v778 = vsub.s32 %v710, %v777
        %v779 = vrot.slane %v691, %v778
        %v780 = vlaneseq
        %v781 = vshrl.u32 %v780, 7
        %v782 = vsub.s32 %v715, %v781
        %v783 = vrot.slane %v692, %v782
        %v784 = vsel %vm720, %v783, %v779
        %vm785 = vcmask 1041409
        %v786 = vsel %vm785, %v730, %v721
        %vm787 = vcmask 1042434
        %v788 = vsel %vm787, %v739, %v786
        %vm789 = vcmask 1043459
        %v790 = vsel %vm789, %v748, %v788
        %vm791 = vcmask 1044484
        %v792 = vsel %vm791, %v757, %v790
        %vm793 = vcmask 1045509
        %v794 = vsel %vm793, %v766, %v792
        %vm795 = vcmask 1046534
        %v796 = vsel %vm795, %v775, %v794
        %vm797 = vcmask 1047559
        %v798 = vsel %vm797, %v784, %v796
        %vm800 = vcmask 130048
        %v801 = vsel %vm800, %v798, -inf
        %802 = vmax.xlane.f32.xlu0 %v801
        %v803 = vpop.xlane.xlu0 %802
        %v805 = vlaneseq
        %v806 = vshrl.u32 %v805, 7
        %v807 = vsub.s32 0, %v806
        %v808 = vrot.slane %v803, %v807
        %v809 = vlaneseq
        %v810 = vshrl.u32 %v809, 7
        %v811 = vsub.s32 1, %v810
        %v812 = vrot.slane %v803, %v811
        %v813 = vlaneseq
        %v814 = vshrl.u32 %v813, 7
        %v815 = vsub.s32 2, %v814
        %v816 = vrot.slane %v803, %v815
        %v817 = vlaneseq
        %v818 = vshrl.u32 %v817, 7
        %v819 = vsub.s32 3, %v818
        %v820 = vrot.slane %v803, %v819
        %v821 = vlaneseq
        %v822 = vshrl.u32 %v821, 7
        %v823 = vsub.s32 4, %v822
        %v824 = vrot.slane %v803, %v823
        %v825 = vlaneseq
        %v826 = vshrl.u32 %v825, 7
        %v827 = vsub.s32 5, %v826
        %v828 = vrot.slane %v803, %v827
        %v829 = vlaneseq
        %v830 = vshrl.u32 %v829, 7
        %v831 = vsub.s32 6, %v830
        %v832 = vrot.slane %v803, %v831
        %v833 = vlaneseq
        %v834 = vshrl.u32 %v833, 7
        %v835 = vsub.s32 7, %v834
        %v836 = vrot.slane %v803, %v835
        %v845 = vsub.f32 %v677, %v808
        %v846 = vsub.f32 %v678, %v808
        %v847 = vsub.f32 %v679, %v812
        %v848 = vsub.f32 %v680, %v812
        %v849 = vsub.f32 %v681, %v816
        %v850 = vsub.f32 %v682, %v816
        %v851 = vsub.f32 %v683, %v820
        %v852 = vsub.f32 %v684, %v820
        %v853 = vsub.f32 %v685, %v824
        %v854 = vsub.f32 %v686, %v824
        %v855 = vsub.f32 %v687, %v828
        %v856 = vsub.f32 %v688, %v828
        %v857 = vsub.f32 %v689, %v832
        %v858 = vsub.f32 %v690, %v832
        %v859 = vsub.f32 %v691, %v836
        %v860 = vsub.f32 %v692, %v836
        %v861 = vmul.f32 %v845, 1.442695
        %v862 = vpow.pop %v861
        %v863 = vmul.f32 %v846, 1.442695
        %v864 = vpow.pop %v863
        %v865 = vmul.f32 %v847, 1.442695
        %v866 = vpow.pop %v865
        %v867 = vmul.f32 %v848, 1.442695
        %v868 = vpow.pop %v867
        %v869 = vmul.f32 %v849, 1.442695
        %v870 = vpow.pop %v869
        %v871 = vmul.f32 %v850, 1.442695
        %v872 = vpow.pop %v871
        %v873 = vmul.f32 %v851, 1.442695
        %v874 = vpow.pop %v873
        %v875 = vmul.f32 %v852, 1.442695
        %v876 = vpow.pop %v875
        %v877 = vmul.f32 %v853, 1.442695
        %v878 = vpow.pop %v877
        %v879 = vmul.f32 %v854, 1.442695
        %v880 = vpow.pop %v879
        %v881 = vmul.f32 %v855, 1.442695
        %v882 = vpow.pop %v881
        %v883 = vmul.f32 %v856, 1.442695
        %v884 = vpow.pop %v883
        %v885 = vmul.f32 %v857, 1.442695
        %v886 = vpow.pop %v885
        %v887 = vmul.f32 %v858, 1.442695
        %v888 = vpow.pop %v887
        %v889 = vmul.f32 %v859, 1.442695
        %v890 = vpow.pop %v889
        %v891 = vmul.f32 %v860, 1.442695
        %v892 = vpow.pop %v891
        %909 = vset.pattern.permute.xlu0 0
        %910 = vperm.xlu0 %909, %v862
        %v911 = vpop.permute.xlu0 %910
        %912 = vset.pattern.permute.xlu0 0
        %913 = vperm.xlu0 %912, %v864
        %v914 = vpop.permute.xlu0 %913
        %915 = vset.pattern.permute.xlu0 0
        %916 = vperm.xlu0 %915, %v866
        %v917 = vpop.permute.xlu0 %916
        %918 = vset.pattern.permute.xlu0 0
        %919 = vperm.xlu0 %918, %v868
        %v920 = vpop.permute.xlu0 %919
        %921 = vset.pattern.permute.xlu0 0
        %922 = vperm.xlu0 %921, %v870
        %v923 = vpop.permute.xlu0 %922
        %924 = vset.pattern.permute.xlu0 0
        %925 = vperm.xlu0 %924, %v872
        %v926 = vpop.permute.xlu0 %925
        %927 = vset.pattern.permute.xlu0 0
        %928 = vperm.xlu0 %927, %v874
        %v929 = vpop.permute.xlu0 %928
        %930 = vset.pattern.permute.xlu0 0
        %931 = vperm.xlu0 %930, %v876
        %v932 = vpop.permute.xlu0 %931
        %933 = vset.pattern.permute.xlu0 0
        %934 = vperm.xlu0 %933, %v878
        %v935 = vpop.permute.xlu0 %934
        %936 = vset.pattern.permute.xlu0 0
        %937 = vperm.xlu0 %936, %v880
        %v938 = vpop.permute.xlu0 %937
        %939 = vset.pattern.permute.xlu0 0
        %940 = vperm.xlu0 %939, %v882
        %v941 = vpop.permute.xlu0 %940
        %942 = vset.pattern.permute.xlu0 0
        %943 = vperm.xlu0 %942, %v884
        %v944 = vpop.permute.xlu0 %943
        %945 = vset.pattern.permute.xlu0 0
        %946 = vperm.xlu0 %945, %v886
        %v947 = vpop.permute.xlu0 %946
        %948 = vset.pattern.permute.xlu0 0
        %949 = vperm.xlu0 %948, %v888
        %v950 = vpop.permute.xlu0 %949
        %951 = vset.pattern.permute.xlu0 0
        %952 = vperm.xlu0 %951, %v890
        %v953 = vpop.permute.xlu0 %952
        %954 = vset.pattern.permute.xlu0 0
        %955 = vperm.xlu0 %954, %v892
        %v956 = vpop.permute.xlu0 %955
        %v957 = vlaneseq
        %v958 = vshrl.u32 %v957, 7
        %v959 = vsub.s32 %v710, %v958
        %v960 = vrot.slane %v911, %v959
        %v961 = vlaneseq
        %v962 = vshrl.u32 %v961, 7
        %v963 = vsub.s32 %v715, %v962
        %v964 = vrot.slane %v914, %v963
        %v965 = vsel %vm720, %v964, %v960
        %v966 = vlaneseq
        %v967 = vshrl.u32 %v966, 7
        %v968 = vsub.s32 %v710, %v967
        %v969 = vrot.slane %v917, %v968
        %v970 = vlaneseq
        %v971 = vshrl.u32 %v970, 7
        %v972 = vsub.s32 %v715, %v971
        %v973 = vrot.slane %v920, %v972
        %v974 = vsel %vm720, %v973, %v969
        %v975 = vlaneseq
        %v976 = vshrl.u32 %v975, 7
        %v977 = vsub.s32 %v710, %v976
        %v978 = vrot.slane %v923, %v977
        %v979 = vlaneseq
        %v980 = vshrl.u32 %v979, 7
        %v981 = vsub.s32 %v715, %v980
        %v982 = vrot.slane %v926, %v981
        %v983 = vsel %vm720, %v982, %v978
        %v984 = vlaneseq
        %v985 = vshrl.u32 %v984, 7
        %v986 = vsub.s32 %v710, %v985
        %v987 = vrot.slane %v929, %v986
        %v988 = vlaneseq
        %v989 = vshrl.u32 %v988, 7
        %v990 = vsub.s32 %v715, %v989
        %v991 = vrot.slane %v932, %v990
        %v992 = vsel %vm720, %v991, %v987
        %v993 = vlaneseq
        %v994 = vshrl.u32 %v993, 7
        %v995 = vsub.s32 %v710, %v994
        %v996 = vrot.slane %v935, %v995
        %v997 = vlaneseq
        %v998 = vshrl.u32 %v997, 7
        %v999 = vsub.s32 %v715, %v998
        %v1000 = vrot.slane %v938, %v999
        %v1001 = vsel %vm720, %v1000, %v996
        %v1002 = vlaneseq
        %v1003 = vshrl.u32 %v1002, 7
        %v1004 = vsub.s32 %v710, %v1003
        %v1005 = vrot.slane %v941, %v1004
        %v1006 = vlaneseq
        %v1007 = vshrl.u32 %v1006, 7
        %v1008 = vsub.s32 %v715, %v1007
        %v1009 = vrot.slane %v944, %v1008
        %v1010 = vsel %vm720, %v1009, %v1005
        %v1011 = vlaneseq
        %v1012 = vshrl.u32 %v1011, 7
        %v1013 = vsub.s32 %v710, %v1012
        %v1014 = vrot.slane %v947, %v1013
        %v1015 = vlaneseq
        %v1016 = vshrl.u32 %v1015, 7
        %v1017 = vsub.s32 %v715, %v1016
        %v1018 = vrot.slane %v950, %v1017
        %v1019 = vsel %vm720, %v1018, %v1014
        %v1020 = vlaneseq
        %v1021 = vshrl.u32 %v1020, 7
        %v1022 = vsub.s32 %v710, %v1021
        %v1023 = vrot.slane %v953, %v1022
        %v1024 = vlaneseq
        %v1025 = vshrl.u32 %v1024, 7
        %v1026 = vsub.s32 %v715, %v1025
        %v1027 = vrot.slane %v956, %v1026
        %v1028 = vsel %vm720, %v1027, %v1023
        %v1029 = vsel %vm785, %v974, %v965
        %v1030 = vsel %vm787, %v983, %v1029
        %v1031 = vsel %vm789, %v992, %v1030
        %v1032 = vsel %vm791, %v1001, %v1031
        %v1033 = vsel %vm793, %v1010, %v1032
        %v1034 = vsel %vm795, %v1019, %v1033
        %v1035 = vsel %vm797, %v1028, %v1034
        %v1037 = vsel %vm800, %v1035, 0.0
        %1038 = vadd.xlane.f32.xlu0 %v1037
        %v1039 = vpop.xlane.xlu0 %1038
        %v1040 = vrcp.pop %v1039
        %v1042 = vlaneseq
        %v1043 = vshrl.u32 %v1042, 7
        %v1044 = vsub.s32 0, %v1043
        %v1045 = vrot.slane %v1040, %v1044
        %v1046 = vlaneseq
        %v1047 = vshrl.u32 %v1046, 7
        %v1048 = vsub.s32 1, %v1047
        %v1049 = vrot.slane %v1040, %v1048
        %v1050 = vlaneseq
        %v1051 = vshrl.u32 %v1050, 7
        %v1052 = vsub.s32 2, %v1051
        %v1053 = vrot.slane %v1040, %v1052
        %v1054 = vlaneseq
        %v1055 = vshrl.u32 %v1054, 7
        %v1056 = vsub.s32 3, %v1055
        %v1057 = vrot.slane %v1040, %v1056
        %v1058 = vlaneseq
        %v1059 = vshrl.u32 %v1058, 7
        %v1060 = vsub.s32 4, %v1059
        %v1061 = vrot.slane %v1040, %v1060
        %v1062 = vlaneseq
        %v1063 = vshrl.u32 %v1062, 7
        %v1064 = vsub.s32 5, %v1063
        %v1065 = vrot.slane %v1040, %v1064
        %v1066 = vlaneseq
        %v1067 = vshrl.u32 %v1066, 7
        %v1068 = vsub.s32 6, %v1067
        %v1069 = vrot.slane %v1040, %v1068
        %v1070 = vlaneseq
        %v1071 = vshrl.u32 %v1070, 7
        %v1072 = vsub.s32 7, %v1071
        %v1073 = vrot.slane %v1040, %v1072
        %v1082 = vmul.f32 %v862, %v1045
        %v1083 = vmul.f32 %v864, %v1045
        %v1084 = vmul.f32 %v866, %v1049
        %v1085 = vmul.f32 %v868, %v1049
        %v1086 = vmul.f32 %v870, %v1053
        %v1087 = vmul.f32 %v872, %v1053
        %v1088 = vmul.f32 %v874, %v1057
        %v1089 = vmul.f32 %v876, %v1057
        %v1090 = vmul.f32 %v878, %v1061
        %v1091 = vmul.f32 %v880, %v1061
        %v1092 = vmul.f32 %v882, %v1065
        %v1093 = vmul.f32 %v884, %v1065
        %v1094 = vmul.f32 %v886, %v1069
        %v1095 = vmul.f32 %v888, %v1069
        %v1096 = vmul.f32 %v890, %v1073
        %v1097 = vmul.f32 %v892, %v1073
        %1114 = vset.pattern.permute.xlu0 0
        %1115 = vperm.xlu0 %1114, %v1082
        %v1116 = vpop.permute.xlu0 %1115
        %1117 = vset.pattern.permute.xlu0 0
        %1118 = vperm.xlu0 %1117, %v1083
        %v1119 = vpop.permute.xlu0 %1118
        %1120 = vset.pattern.permute.xlu0 0
        %1121 = vperm.xlu0 %1120, %v1084
        %v1122 = vpop.permute.xlu0 %1121
        %1123 = vset.pattern.permute.xlu0 0
        %1124 = vperm.xlu0 %1123, %v1085
        %v1125 = vpop.permute.xlu0 %1124
        %1126 = vset.pattern.permute.xlu0 0
        %1127 = vperm.xlu0 %1126, %v1086
        %v1128 = vpop.permute.xlu0 %1127
        %1129 = vset.pattern.permute.xlu0 0
        %1130 = vperm.xlu0 %1129, %v1087
        %v1131 = vpop.permute.xlu0 %1130
        %1132 = vset.pattern.permute.xlu0 0
        %1133 = vperm.xlu0 %1132, %v1088
        %v1134 = vpop.permute.xlu0 %1133
        %1135 = vset.pattern.permute.xlu0 0
        %1136 = vperm.xlu0 %1135, %v1089
        %v1137 = vpop.permute.xlu0 %1136
        %1138 = vset.pattern.permute.xlu0 0
        %1139 = vperm.xlu0 %1138, %v1090
        %v1140 = vpop.permute.xlu0 %1139
        %1141 = vset.pattern.permute.xlu0 0
        %1142 = vperm.xlu0 %1141, %v1091
        %v1143 = vpop.permute.xlu0 %1142
        %1144 = vset.pattern.permute.xlu0 0
        %1145 = vperm.xlu0 %1144, %v1092
        %v1146 = vpop.permute.xlu0 %1145
        %1147 = vset.pattern.permute.xlu0 0
        %1148 = vperm.xlu0 %1147, %v1093
        %v1149 = vpop.permute.xlu0 %1148
        %1150 = vset.pattern.permute.xlu0 0
        %1151 = vperm.xlu0 %1150, %v1094
        %v1152 = vpop.permute.xlu0 %1151
        %1153 = vset.pattern.permute.xlu0 0
        %1154 = vperm.xlu0 %1153, %v1095
        %v1155 = vpop.permute.xlu0 %1154
        %1156 = vset.pattern.permute.xlu0 0
        %1157 = vperm.xlu0 %1156, %v1096
        %v1158 = vpop.permute.xlu0 %1157
        %1159 = vset.pattern.permute.xlu0 0
        %1160 = vperm.xlu0 %1159, %v1097
        %v1161 = vpop.permute.xlu0 %1160
        %v1162 = vlaneseq
        %v1163 = vshrl.u32 %v1162, 7
        %v1164 = vsub.s32 %v710, %v1163
        %v1165 = vrot.slane %v1116, %v1164
        %v1166 = vlaneseq
        %v1167 = vshrl.u32 %v1166, 7
        %v1168 = vsub.s32 %v715, %v1167
        %v1169 = vrot.slane %v1119, %v1168
        %v1170 = vsel %vm720, %v1169, %v1165
        %v1171 = vlaneseq
        %v1172 = vshrl.u32 %v1171, 7
        %v1173 = vsub.s32 %v710, %v1172
        %v1174 = vrot.slane %v1122, %v1173
        %v1175 = vlaneseq
        %v1176 = vshrl.u32 %v1175, 7
        %v1177 = vsub.s32 %v715, %v1176
        %v1178 = vrot.slane %v1125, %v1177
        %v1179 = vsel %vm720, %v1178, %v1174
        %v1180 = vlaneseq
        %v1181 = vshrl.u32 %v1180, 7
        %v1182 = vsub.s32 %v710, %v1181
        %v1183 = vrot.slane %v1128, %v1182
        %v1184 = vlaneseq
        %v1185 = vshrl.u32 %v1184, 7
        %v1186 = vsub.s32 %v715, %v1185
        %v1187 = vrot.slane %v1131, %v1186
        %v1188 = vsel %vm720, %v1187, %v1183
        %v1189 = vlaneseq
        %v1190 = vshrl.u32 %v1189, 7
        %v1191 = vsub.s32 %v710, %v1190
        %v1192 = vrot.slane %v1134, %v1191
        %v1193 = vlaneseq
        %v1194 = vshrl.u32 %v1193, 7
        %v1195 = vsub.s32 %v715, %v1194
        %v1196 = vrot.slane %v1137, %v1195
        %v1197 = vsel %vm720, %v1196, %v1192
        %v1198 = vlaneseq
        %v1199 = vshrl.u32 %v1198, 7
        %v1200 = vsub.s32 %v710, %v1199
        %v1201 = vrot.slane %v1140, %v1200
        %v1202 = vlaneseq
        %v1203 = vshrl.u32 %v1202, 7
        %v1204 = vsub.s32 %v715, %v1203
        %v1205 = vrot.slane %v1143, %v1204
        %v1206 = vsel %vm720, %v1205, %v1201
        %v1207 = vlaneseq
        %v1208 = vshrl.u32 %v1207, 7
        %v1209 = vsub.s32 %v710, %v1208
        %v1210 = vrot.slane %v1146, %v1209
        %v1211 = vlaneseq
        %v1212 = vshrl.u32 %v1211, 7
        %v1213 = vsub.s32 %v715, %v1212
        %v1214 = vrot.slane %v1149, %v1213
        %v1215 = vsel %vm720, %v1214, %v1210
        %v1216 = vlaneseq
        %v1217 = vshrl.u32 %v1216, 7
        %v1218 = vsub.s32 %v710, %v1217
        %v1219 = vrot.slane %v1152, %v1218
        %v1220 = vlaneseq
        %v1221 = vshrl.u32 %v1220, 7
        %v1222 = vsub.s32 %v715, %v1221
        %v1223 = vrot.slane %v1155, %v1222
        %v1224 = vsel %vm720, %v1223, %v1219
        %v1225 = vlaneseq
        %v1226 = vshrl.u32 %v1225, 7
        %v1227 = vsub.s32 %v710, %v1226
        %v1228 = vrot.slane %v1158, %v1227
        %v1229 = vlaneseq
        %v1230 = vshrl.u32 %v1229, 7
        %v1231 = vsub.s32 %v715, %v1230
        %v1232 = vrot.slane %v1161, %v1231
        %v1233 = vsel %vm720, %v1232, %v1228
        %v1234 = vsel %vm785, %v1179, %v1170
        %v1235 = vsel %vm787, %v1188, %v1234
        %v1236 = vsel %vm789, %v1197, %v1235
        %v1237 = vsel %vm791, %v1206, %v1236
        %v1238 = vsel %vm793, %v1215, %v1237
        %v1239 = vsel %vm795, %v1224, %v1238
        %v1240 = vsel %vm797, %v1233, %v1239
        %1242 = vst.msk [vmem:[%s299] sm:$0xff] %vm800, %v1240
        %s1243 = sand.u32 %s170, 1
        %s1244 = scalar_lea.sflag [#allocation5], %s1243
        %s1245 = sand.u32 %s170, 1
        %s1246 = smul.addr %s1245, 8
        %s1247 = scalar_lea.vmem [#allocation8], %s1246
        // Predicated region
        $region53: #{attention_forward.1} parent=43 // pred_check
          %p1248 = pneg %p180
        $region54: #{attention_forward.1} parent=43 // pred_check_branch
          %1250 = sbr.rel (%p1248) target = $region56
        $region55: #{attention_forward.1} parent=43 // pred_region
          %s1252 = ssub.s32 128, 128
          %1253 = vsyncadd %s1244, %s1252
          %s1254 = smul.addr %s26, 128
          %s1255 = scalar_lea.hbm %s6, %s1254
          %s1257 = sshll.u32 %s1247, 4
          %s1258 = int_to_ptr.vmem [resolvable:$true] %s1257
          %1260 = dma.vmem_to_hbm [thread:$0]  %s1258, 128, %s1255, %s1244
        $region56: #{attention_forward.1} parent=43 // pred_fallthru
          _
      $region44: #{attention_forward.1} parent=5 // pred_fallthru
        _
      %p1261 = scmp.le.s32.totalorder 2, %s21
      // Predicated region
      $region57: #{attention_forward.1} parent=5 // pred_check
        %p1262 = pneg %p1261
      $region58: #{attention_forward.1} parent=5 // pred_check_branch
        %1264 = sbr.rel (%p1262) target = $region60
      $region59: #{attention_forward.1} parent=5 // pred_region
        %s1265 = ssub.s32 %s21, 2
        // Predicated region
        $region61: #{attention_forward.1} parent=59 // pred_check
          %p1266 = pneg %p186
        $region62: #{attention_forward.1} parent=59 // pred_check_branch
          %1268 = sbr.rel (%p1266) target = $region64
        $region63: #{attention_forward.1} parent=59 // pred_region
          %s1269 = sand.u32 %s171, 1
          %s1270 = scalar_lea.sflag [#allocation5], %s1269
          %s1271 = sand.u32 %s171, 1
          %s1272 = smul.addr %s1271, 8
          %s1273 = scalar_lea.vmem [#allocation8], %s1272
          %1274 = dma.done %s1270, 128
        $region64: #{attention_forward.1} parent=59 // pred_fallthru
          _
      $region60: #{attention_forward.1} parent=5 // pred_fallthru
        _
    $region6: #{attention_forward.1} parent=1 // loop_footer
      %s25 = sadd.s32 1, %s21
    $region7: #{attention_forward.1} parent=1 // loop_footer_branch
      %20 = sbr.rel target = $region3
    $region8: #{attention_forward.1} parent=1 // loop_exit
      _
    %1275 = vsyncpa [#allocation4], 1
    %s1276 = scalar_lea.sflag [#allocation4], 1
    %1277 = vsyncpa %s1276, 1
    %1278 = vsyncpa [#allocation7], 1
    %1279 = vsyncpa [#allocation5], 1
    %s1280 = scalar_lea.sflag [#allocation5], 1
    %1281 = vsyncpa %s1280, 1

</llo_original>
